<compile_context>
chip_gen: v5e
topology: v5e:2x2
jax: 0.10.0
libtpu: 0.0.40
codegen_flags: <defaults>
</compile_context>

<pallas_src>
import functools

import numpy as np

import jax
import jax.numpy as jnp
from jax.experimental import pallas as pl
from jax.experimental.pallas import tpu as pltpu


def _fwm_index(M, rho):
    """Triplet index set for the additive FWM part (reduce-1 style)."""
    p = M // 2
    S = []
    for n1 in range(-p, p + 1):
        for n2 in range(-p, p + 1):
            if n1 * n2 != 0 and abs(n1 * n2) <= rho * p and n1 >= n2:
                S.append((n1, n2))
    return S


def _build_plan(index_set):
    """Group triplets by n2 and pair (+a, -a) so the pol-summed pair product g_{n2} is computed
    once per |n2|; negative groups are derived via g_{-a}[k] = conj(g_{a}[k-a])."""
    groups = {}
    for t, (n1, n2) in enumerate(index_set):
        groups.setdefault(n2, []).append((t, n1))
    plan = []
    for a in sorted({abs(n2) for n2 in groups}):
        pos = tuple(groups[a]) if a in groups else None
        neg = tuple(groups[-a]) if -a in groups else None
        plan.append((a, pos, neg))
    return tuple(plan)


@functools.lru_cache(maxsize=None)
def _pltpu_roll_is_like_jnp_roll():
    """Probe pltpu.roll's shift convention once (True iff pltpu.roll == jnp.roll semantics).
    The end-to-end check against the jnp reference in __main__ would catch any silent flip."""
    def probe(x_ref, o_ref):
        o_ref[...] = pltpu.roll(x_ref[...], 1, 1)

    with jax.ensure_compile_time_eval():
        x = jax.lax.broadcasted_iota(jnp.float32, (8, 128), 1)
        out = pl.pallas_call(
            probe, out_shape=jax.ShapeDtypeStruct((8, 128), jnp.float32))(x)
        return int(out[0, 0]) == 127  # jnp.roll(x, 1)[..., 0] == x[..., -1]


def _ampbc_kernel(plan, npol, roll_like_jnp,
                  xr_ref, xi_ref, p_ref, wr_ref, wi_ref, c00_ref,
                  yr_ref, yi_ref):
    L = xr_ref.shape[-1]

    # Per-pol planes, each a full [Bt, L] tile (8 sublanes when Bt == 8).
    xr = [xr_ref[m, 0] for m in range(npol)]
    xi = [xi_ref[m, 0] for m in range(npol)]
    pcol = p_ref[0]                 # [Bt, 1] per-batch power P (sqrt(P) folded out analytically)
    c00 = c00_ref[0]

    def roll_plus(a, n):
        # returns array whose bin k equals a[(k + n) % L]  (bins live on the lane axis, axis=1)
        s = ((-n) % L) if roll_like_jnp else (n % L)
        return a if s == 0 else pltpu.roll(a, s, 1)

    def pair_product(br, bi):
        # g[k] = sum_p X_p[k] * conj(X_p[k+n2]),  (br, bi) = X[k+n2]
        gr = xr[0] * br[0] + xi[0] * bi[0]
        gi = xi[0] * br[0] - xr[0] * bi[0]
        for m in range(1, npol):
            gr = gr + xr[m] * br[m] + xi[m] * bi[m]
            gi = gi + xi[m] * br[m] - xr[m] * bi[m]
        return gr, gi

    acc_r = [None] * npol
    acc_i = [None] * npol

    def process_group(gr, gi, items, br, bi, conj_g, shift_off):
        # s_m = sum_t W[m,t] * h_t   with h_t = roll(g, n1 [+ shift_off]) (conj folded into signs),
        # then acc_m += s_m * b_m    (one complex MAC per group per pol).
        s_r = [None] * npol
        s_i = [None] * npol
        for (t, n1) in items:
            hr = roll_plus(gr, n1 + shift_off)
            hi = roll_plus(gi, n1 + shift_off)
            for m in range(npol):
                w_r = wr_ref[m, t]
                w_i = wi_ref[m, t]
                if conj_g:      # W * conj(h)
                    tr = w_r * hr + w_i * hi
                    ti = w_i * hr - w_r * hi
                else:           # W * h
                    tr = w_r * hr - w_i * hi
                    ti = w_r * hi + w_i * hr
                s_r[m] = tr if s_r[m] is None else s_r[m] + tr
                s_i[m] = ti if s_i[m] is None else s_i[m] + ti
        for m in range(npol):
            vr = s_r[m] * br[m] - s_i[m] * bi[m]
            vi = s_r[m] * bi[m] + s_i[m] * br[m]
            acc_r[m] = vr if acc_r[m] is None else acc_r[m] + vr
            acc_i[m] = vi if acc_i[m] is None else acc_i[m] + vi

    # ---- additive FWM, grouped by |n2| (positive group computes g, negative reuses it) ----
    for n2p, pos_items, neg_items in plan:
        gr_p = gi_p = None
        if pos_items is not None:
            br = [roll_plus(xr[m], n2p) for m in range(npol)]     # X_m[k+n2p]
            bi = [roll_plus(xi[m], n2p) for m in range(npol)]
            gr_p, gi_p = pair_product(br, bi)
            process_group(gr_p, gi_p, pos_items, br, bi, conj_g=False, shift_off=0)
        if neg_items is not None:
            br = [roll_plus(xr[m], -n2p) for m in range(npol)]    # X_m[k-n2p]
            bi = [roll_plus(xi[m], -n2p) for m in range(npol)]
            if gr_p is not None:
                # g_{-a}[k+n1] = conj(g_{a}[k+n1-a]); shift folded into the roll, conj into signs.
                process_group(gr_p, gi_p, neg_items, br, bi, conj_g=True, shift_off=-n2p)
            else:
                gr_n, gi_n = pair_product(br, bi)
                process_group(gr_n, gi_n, neg_items, br, bi, conj_g=False, shift_off=0)

    # ---- deferred multiplicative phase, fused into the stores:
    #      y = X * exp(j*C00*P*sum_pol|X|^2) + P * FWM(X)
    pw = xr[0] * xr[0] + xi[0] * xi[0]
    for m in range(1, npol):
        pw = pw + xr[m] * xr[m] + xi[m] * xi[m]
    phi = (c00 * pcol) * pw
    cph = jnp.cos(phi)
    sph = jnp.sin(phi)
    for m in range(npol):
        fr = pcol * acc_r[m] if acc_r[m] is not None else 0.0
        fi = pcol * acc_i[m] if acc_i[m] is not None else 0.0
        yr_ref[m, 0] = xr[m] * cph - xi[m] * sph + fr
        yi_ref[m, 0] = xr[m] * sph + xi[m] * cph + fi


def ampbc_step_pallas(Xr, Xi, Pcol, Wr, Wi, C00, index_set):
    npol, Bg, Bt, L = Xr.shape
    plan = _build_plan(tuple(index_set))
    roll_like_jnp = _pltpu_roll_is_like_jnp_roll()
    kernel = functools.partial(_ampbc_kernel, plan, npol, roll_like_jnp)

    blk_x = pl.BlockSpec((npol, 1, Bt, L), lambda g: (0, g, 0, 0))
    blk_p = pl.BlockSpec((1, Bt, 1), lambda g: (g, 0, 0))
    smem = pl.BlockSpec(memory_space=pltpu.MemorySpace.SMEM)
    out_blk = pl.BlockSpec((npol, 1, Bt, L), lambda g: (0, g, 0, 0))

    # Explicit VMEM budget (double-buffered xr/xi in + yr/yi out, f32) + headroom; the v5e default
    # scoped limit is only 16 MiB.  Clamped to 64 MiB (v7x physical).
    block_bytes = 4 * npol * Bt * L * 4
    vmem_limit = int(min(64 << 20, max(16 << 20, 2 * block_bytes + (4 << 20))))

    yr, yi = pl.pallas_call(
        kernel,
        grid=(Bg,),
        in_specs=[blk_x, blk_x, blk_p, smem, smem, smem],
        out_specs=[out_blk, out_blk],
        out_shape=[jax.ShapeDtypeStruct((npol, Bg, Bt, L), jnp.float32),
                   jax.ShapeDtypeStruct((npol, Bg, Bt, L), jnp.float32)],
        compiler_params=pltpu.CompilerParams(
            dimension_semantics=("parallel",),
            vmem_limit_bytes=vmem_limit),
    )(Xr, Xi, Pcol, Wr, Wi, C00)
    return yr, yi


def eq_fre_ampbc_forward(x, task_info, Wr, Wi, C00, index_set, overlaps):
    """x: [B, L, Nmodes] complex64, task_info: [B, 4] -> [B, L - overlaps, Nmodes] complex64."""
    B, L, Nmodes = x.shape
    P = (10.0 ** (task_info[:, 0] / 10.0) / Nmodes).astype(jnp.float32)     # [B]

    # FFT over the symbol axis with frequency bins on the fast (lane) axis: [Nmodes, B, L].
    X = jnp.fft.fft(jnp.transpose(x, (2, 0, 1)), axis=-1)
    Xr = jnp.real(X).astype(jnp.float32)
    Xi = jnp.imag(X).astype(jnp.float32)

    # Pack Bt batches into the sublane axis (8 rows for f32) so the kernel works on full vregs.
    # TODO(synk): on v7x with Bg==1 a second 'parallel' L-chunk grid axis (wrapped halo) would
    #             feed both TensorCores; kept single-axis here for the small shapes exercised.
    Bt = min(8, B)
    Bg = -(-B // Bt)
    Bpad = Bg * Bt
    if Bpad != B:
        Xr = jnp.pad(Xr, ((0, 0), (0, Bpad - B), (0, 0)))
        Xi = jnp.pad(Xi, ((0, 0), (0, Bpad - B), (0, 0)))
        P = jnp.pad(P, (0, Bpad - B))
    Xr = Xr.reshape(Nmodes, Bg, Bt, L)
    Xi = Xi.reshape(Nmodes, Bg, Bt, L)
    Pcol = P.reshape(Bg, Bt, 1)

    Yr, Yi = ampbc_step_pallas(Xr, Xi, Pcol,
                               Wr.astype(jnp.float32), Wi.astype(jnp.float32),
                               C00.astype(jnp.float32), index_set)

    Y = (Yr + 1j * Yi).astype(jnp.complex64).reshape(Nmodes, Bpad, L)[:, :B]
    y = jnp.fft.ifft(Y, axis=-1)
    y = jnp.transpose(y, (1, 2, 0))                                          # [B, L, Nmodes]
    ov2 = overlaps // 2
    return y[:, ov2:L - ov2, :]


def _reference_forward(x, task_info, Wr, Wi, C00, index_set, overlaps):
    """Pure-jnp reference of the documented formula (unfolded sqrt(P) path), for self-consistency."""
    B, L, N = x.shape
    P = 10.0 ** (task_info[:, 0] / 10.0) / N
    sp = jnp.sqrt(P)[:, None, None]
    X = jnp.fft.fft(x, axis=1)
    U = (X * sp).astype(jnp.complex64)
    W = (Wr + 1j * Wi).astype(jnp.complex64)            # [N, T]
    pw = jnp.sum(jnp.abs(U) ** 2, axis=-1, keepdims=True)
    phase = U * jnp.exp(1j * C00[0] * pw)
    fwm = jnp.zeros_like(U)
    for t, (n1, n2) in enumerate(index_set):
        A = jnp.roll(U, -n1, axis=1)                    # u[k+n1]
        Cc = jnp.roll(U, -(n1 + n2), axis=1)            # u[k+n1+n2]
        Bv = jnp.roll(U, -n2, axis=1)                   # u[k+n2]
        inner = jnp.sum(A * jnp.conj(Cc), axis=-1, keepdims=True)
        fwm = fwm + (inner * Bv) * W[None, None, :, t]
    out = (phase + fwm) / sp
    y = jnp.fft.ifft(out, axis=1)
    ov2 = overlaps // 2
    return y[:, ov2:L - ov2, :]


if __name__ == "__main__":
    # Small, module-consistent shapes: M odd, overlaps = M - 1 (even), rho = M/2 (default rho=-1).
    M = 9
    overlaps = 8
    rho = M / 2
    B, L, Nmodes = 8, 256, 2

    index_set = _fwm_index(M, rho)
    T = len(index_set)

    key = jax.random.PRNGKey(0)
    k1, k2, k3, k4, k5 = jax.random.split(key, 5)
    x = (jax.random.normal(k1, (B, L, Nmodes), jnp.float32)
         + 1j * jax.random.normal(k2, (B, L, Nmodes), jnp.float32)).astype(jnp.complex64)
    p_dbm = jax.random.uniform(k5, (B,), jnp.float32, minval=-2.0, maxval=2.0)
    task_info = jnp.stack(
        [p_dbm, jnp.zeros((B,), jnp.float32),
         jnp.full((B,), 80e9, jnp.float32), jnp.ones((B,), jnp.float32)], axis=1)

    # Deterministic synthetic parameters (fwm_share=False -> per-pol complex filter + scalar C00).
    Wr = 1e-3 * jax.random.normal(k3, (Nmodes, T), jnp.float32)
    Wi = 1e-3 * jax.random.normal(k4, (Nmodes, T), jnp.float32)
    C00 = jnp.array([1e-3], dtype=jnp.float32)

    y = eq_fre_ampbc_forward(x, task_info, Wr, Wi, C00, index_set, overlaps)
    y = jax.block_until_ready(y)

    assert y.shape == (B, L - overlaps, Nmodes), y.shape
    assert y.dtype == jnp.complex64, y.dtype
    assert bool(jnp.all(jnp.isfinite(jnp.real(y)))) and bool(jnp.all(jnp.isfinite(jnp.imag(y))))

    # Self-consistency check of the Pallas kernel against the documented formula (pure jnp).
    y_ref = jax.block_until_ready(
        _reference_forward(x, task_info, Wr, Wi, C00, index_set, overlaps))
    np.testing.assert_allclose(np.asarray(y), np.asarray(y_ref), rtol=2e-3, atol=2e-3)

    print("KERNEL_OK")
</pallas_src>

<mosaic_0001>
module attributes {stable_mosaic.version = 11 : i64} {
  func.func @probe(%arg0: memref<8x128xf32, #tpu.memory_space<vmem>>, %arg1: memref<8x128xf32, #tpu.memory_space<vmem>>) attributes {dimension_semantics = [], scalar_prefetch = 0 : i64, scratch_operands = 0 : i64, tpu.core_type = #tpu.core_type<tc>} {
    %c0 = arith.constant 0 : index
    %c0_0 = arith.constant 0 : index
    %0 = vector.load %arg0[%c0, %c0_0] : memref<8x128xf32, #tpu.memory_space<vmem>>, vector<8x128xf32>
    %c1_i32 = arith.constant 1 : i32
    %1 = tpu.dynamic_rotate %0 by %c1_i32 dim 1 : vector<8x128xf32>, i32 -> vector<8x128xf32>
    %c0_1 = arith.constant 0 : index
    %c0_2 = arith.constant 0 : index
    %2 = vector.load %arg1[%c0_1, %c0_2] : memref<8x128xf32, #tpu.memory_space<vmem>>, vector<8x128xf32>
    tpu.vector_store %arg1[%c0_1, %c0_2], %1 {strides = array<i32>} : memref<8x128xf32, #tpu.memory_space<vmem>>, vector<8x128xf32>,
    return
  }
}

</mosaic_0001>

<llo_original>
// kernel: tpu_custom_call.1
$region0: #{tpu_custom_call.1}
  #allocation0 [shape = 'u32[]', space=smem, size = 0x4, offset = 0x4, fixed_abs, tag = 'smem constant byte address 0x4 - core index']
  #allocation1 [shape = 'u32[72,128]{1,0:T(1,128)}', space=vmem, size = 0x9000, scoped, tag = 'internal scratch']
  %s0 = inlined_call_operand.hbm [shape: f32[8,128], index: 0, kind: input, shape index: {}]
  %s1 = inlined_call_operand.hbm [shape: f32[8,128], index: 1, kind: output, shape index: {}]
  %s2 = sld [smem:[#allocation0]]
  $region18: #{tpu_custom_call.1} parent=0
    _
  %s4 = ssub.s32 1, %s2
  %s5 = scalar_select 0, %s4, %s2
  $region1: #{tpu_custom_call.1} parent=0
    #allocation2 [shape = 'u8[4096]{0}', space=vmem, size = 0x1000, scoped, tag = 'input window, operand 0, single buffered']
    #allocation3 [shape = 's32[1]{0}', space=sflag, size = 0x4, scoped, tag = 'scoped memory for tpu_custom_call.1']
    #allocation4 [shape = 's32[1]{0}', space=sflag, size = 0x4, scoped, tag = 'scoped memory for tpu_custom_call.1']
    #allocation5 [shape = 'u8[4096]{0}', space=vmem, size = 0x1000, scoped, tag = 'output window, operand 0, single buffered']
    %6 = vsyncpa [#allocation3], 0
    %7 = vsyncpa [#allocation4], 0
    // Predicated region
    $region2: #{tpu_custom_call.1} parent=1 // pred_check
      _
    $region3: #{tpu_custom_call.1} parent=1 // pred_check_branch
      %9 = sbr.rel (0) target = $region5
    $region4: #{tpu_custom_call.1} parent=1 // pred_region
      %11 = vsyncadd [#allocation3], 0
      %s13 = sshll.u32 %s0, 4
      %s14 = int_to_ptr.hbm [resolvable:$true] %s13
      %s15 = sshll.u32 [#allocation2], 4
      %s16 = int_to_ptr.vmem [resolvable:$true] %s15
      %18 = dma.hbm_to_vmem [thread:$0]  %s14, 128, %s16, [#allocation3]
    $region5: #{tpu_custom_call.1} parent=1 // pred_fallthru
      _
    // Predicated region
    $region6: #{tpu_custom_call.1} parent=1 // pred_check
      _
    $region7: #{tpu_custom_call.1} parent=1 // pred_check_branch
      %20 = sbr.rel (0) target = $region9
    $region8: #{tpu_custom_call.1} parent=1 // pred_region
      %22 = dma.done [#allocation3], 128
    $region9: #{tpu_custom_call.1} parent=1 // pred_fallthru
      _
    %v23 = vld [vmem:[#allocation2] sm:$0xff]
    %24 = vrot.lane.b32.xlu0 %v23, 1
    %v25 = vpop.permute.xlu0 %24
    %26 = vst [vmem:[#allocation5] sm:$0xff] %v25
    // Predicated region
    $region10: #{tpu_custom_call.1} parent=1 // pred_check
      _
    $region11: #{tpu_custom_call.1} parent=1 // pred_check_branch
      %28 = sbr.rel (0) target = $region13
    $region12: #{tpu_custom_call.1} parent=1 // pred_region
      %30 = vsyncadd [#allocation4], 0
      %s32 = sshll.u32 [#allocation5], 4
      %s33 = int_to_ptr.vmem [resolvable:$true] %s32
      %s34 = sshll.u32 %s1, 4
      %s35 = int_to_ptr.hbm [resolvable:$true] %s34
      %37 = dma.vmem_to_hbm [thread:$0]  %s33, 128, %s35, [#allocation4]
    $region13: #{tpu_custom_call.1} parent=1 // pred_fallthru
      _
    // Predicated region
    $region14: #{tpu_custom_call.1} parent=1 // pred_check
      _
    $region15: #{tpu_custom_call.1} parent=1 // pred_check_branch
      %39 = sbr.rel (0) target = $region17
    $region16: #{tpu_custom_call.1} parent=1 // pred_region
      %41 = dma.done [#allocation4], 128
    $region17: #{tpu_custom_call.1} parent=1 // pred_fallthru
      _
    %42 = vsyncpa [#allocation3], 1
    %43 = vsyncpa [#allocation4], 1

</llo_original>
